<compile_context>
chip_gen: v5e
topology: v5e:2x2
jax: 0.10.0
libtpu: 0.0.40
codegen_flags: <defaults>
</compile_context>

<pallas_src>
import functools

import jax
import jax.numpy as jnp
from jax.experimental import pallas as pl
from jax.experimental.pallas import tpu as pltpu


def _round_up(n, m):
    return ((n + m - 1) // m) * m


def _pad_to(a, shape):
    pads = [(0, t - s) for s, t in zip(a.shape, shape)]
    if all(p == (0, 0) for p in pads):
        return a
    return jnp.pad(a, pads)


def _pad_feature_dim(d):
    # Lane-dense (unmasked vst) weight columns / outputs. 128-aligned for small dims
    # (native on v5e's 4x128x128 MXU); 256-aligned once a dim exceeds 128 so v6e/v7x's
    # 2x256x256 MXU gets full-width passes.
    return _round_up(d, 256) if d > 128 else _round_up(d, 128)


def _choose_block_b(batch, max_block=256, min_steps=4):
    """Sublane-aligned batch tile that divides the (8-aligned) batch exactly and leaves
    >= min_steps grid steps when the batch allows it (2 steps per v7x TensorCore)."""
    b8 = _round_up(batch, 8)
    cap = min(max_block, b8 // min_steps if b8 >= 8 * min_steps else b8)
    cap = max(8, cap - cap % 8)
    for bb in range(cap, 7, -8):
        if b8 % bb == 0:
            return bb
    return 8


def _vmem_cap_bytes():
    # Generation-aware cap: 64 MiB/TC on v7x, 128 MiB on v5e/v6e.
    try:
        return int(pltpu.get_tpu_info().vmem_capacity_bytes * 0.85)
    except Exception:
        return int((64 << 20) * 0.85)


def _epilogue_dtype_for_device(compute_dtype):
    # bf16 bias-add/ReLU only on chips with a bf16 VPU (v6e / v7x); f32 otherwise.
    if jnp.dtype(compute_dtype) != jnp.dtype(jnp.bfloat16):
        return jnp.float32
    try:
        kind = jax.devices()[0].device_kind.lower()
    except Exception:
        return jnp.float32
    if any(g in kind for g in ("v2", "v3", "v4", "v5")):
        return jnp.float32
    return jnp.bfloat16


def _mlp_kernel(x_ref, w1_ref, b1_ref, w2_ref, b2_ref, w3_ref, b3_ref, o_ref,
                *, compute_dtype, epilogue_dtype):
    # relu(relu(x@W1+b1)@W2+b2)@W3+b3. MXU dots accumulate in f32; bias-add/ReLU run in
    # epilogue_dtype (bf16 on v6e/v7x, f32 on v5e); final bias-add stays f32.
    x = x_ref[...].astype(compute_dtype)            # cast streamed x on the VPU
    h = jnp.dot(x, w1_ref[...], preferred_element_type=jnp.float32)
    h = jnp.maximum(h.astype(epilogue_dtype) + b1_ref[...], 0.0).astype(compute_dtype)
    h = jnp.dot(h, w2_ref[...], preferred_element_type=jnp.float32)
    h = jnp.maximum(h.astype(epilogue_dtype) + b2_ref[...], 0.0).astype(compute_dtype)
    out = jnp.dot(h, w3_ref[...], preferred_element_type=jnp.float32)
    o_ref[...] = (out + b3_ref[...]).astype(o_ref.dtype)   # write final dtype directly


@functools.partial(
    jax.jit,
    static_argnames=("out_dim", "compute_dtype", "epilogue_dtype",
                     "single_buffer_weights", "max_block_b"),
)
def _mlp_forward(x, w1p, b1p, w2p, b2p, w3p, b3p, *, out_dim, compute_dtype,
                 epilogue_dtype, single_buffer_weights=True, max_block_b=256):
    B, Din = x.shape
    H1p, H2p, Doutp = w1p.shape[1], w2p.shape[1], w3p.shape[1]
    out_dtype = x.dtype

    block_b = _choose_block_b(B, max_block=max_block_b)
    B_p = _round_up(B, block_b)
    xp = _pad_to(x, (B_p, Din))        # no-op when B already a multiple of block_b

    grid = (B_p // block_b,)

    def const_spec(shape):
        idx = lambda i: (0,) * len(shape)
        if single_buffer_weights:
            # Weight/bias blocks never change across the grid -> single buffer.
            return pl.BlockSpec(shape, idx, pipeline_mode=pl.Buffered(1))
        return pl.BlockSpec(shape, idx)

    # --- VMEM budget / scheduler hint ---
    w_item = jnp.dtype(compute_dtype).itemsize
    e_item = jnp.dtype(epilogue_dtype).itemsize
    o_item = jnp.dtype(out_dtype).itemsize
    weight_bytes = ((Din * H1p + H1p * H2p + H2p * Doutp) * w_item
                    + (H1p + H2p) * e_item + Doutp * 4)
    io_bytes = 2 * block_b * (Din * x.dtype.itemsize + Doutp * o_item)  # 2x-buffered x/out
    act_bytes = block_b * (H1p + H2p) * (4 + w_item)                    # h1/h2 headroom
    wbuf = 1 if single_buffer_weights else 2
    vmem_needed = int(1.5 * (wbuf * weight_bytes + io_bytes + act_bytes)) + (8 << 20)
    vmem_limit = min(max(vmem_needed, 32 << 20), _vmem_cap_bytes())

    cost = pl.CostEstimate(
        flops=2 * B_p * (Din * H1p + H1p * H2p + H2p * Doutp),
        transcendentals=0,
        bytes_accessed=(B_p * Din * x.dtype.itemsize + B_p * Doutp * o_item
                        + weight_bytes),
    )

    kernel = functools.partial(_mlp_kernel, compute_dtype=compute_dtype,
                               epilogue_dtype=epilogue_dtype)

    out_p = pl.pallas_call(
        kernel,
        out_shape=jax.ShapeDtypeStruct((B_p, Doutp), out_dtype),
        grid_spec=pltpu.PrefetchScalarGridSpec(
            num_scalar_prefetch=0,
            grid=grid,
            in_specs=[
                pl.BlockSpec((block_b, Din), lambda i: (i, 0)),  # x tile (K unpadded)
                const_spec((Din, H1p)),                          # W1 (resident)
                const_spec((1, H1p)),                            # b1
                const_spec((H1p, H2p)),                          # W2
                const_spec((1, H2p)),                            # b2
                const_spec((H2p, Doutp)),                        # W3
                const_spec((1, Doutp)),                          # b3
            ],
            out_specs=pl.BlockSpec((block_b, Doutp), lambda i: (i, 0)),
        ),
        compiler_params=pltpu.CompilerParams(
            dimension_semantics=("parallel",),
            vmem_limit_bytes=vmem_limit,
        ),
        cost_estimate=cost,
    )(xp, w1p, b1p, w2p, b2p, w3p, b3p)

    # Slice off feature/batch padding; dtype already final (no wrapper-side cast).
    return out_p[:B, :out_dim]


class PallasMLP:
    """decoder = Linear -> ReLU -> Linear -> ReLU -> Linear, fused in one Pallas kernel.

    Weights are padded to lane-dense shapes and cast to the MXU compute dtype ONCE at
    construction, not per forward call.
    """

    def __init__(self, params, compute_dtype=jnp.bfloat16, epilogue_dtype=None):
        w1, b1, w2, b2, w3, b3 = params
        self.compute_dtype = compute_dtype
        self.epilogue_dtype = (epilogue_dtype if epilogue_dtype is not None
                               else _epilogue_dtype_for_device(compute_dtype))
        Din, H1 = w1.shape
        H2 = w2.shape[1]
        self.out_dim = w3.shape[1]
        H1p = _pad_feature_dim(H1)
        H2p = _pad_feature_dim(H2)
        Doutp = _pad_feature_dim(self.out_dim)
        # The streamed K of the first layer (Din) stays unpadded: a block dim equal to
        # the full array dim satisfies the (8,128) rule and avoids 4x x-tile DMA.
        self._params = jax.block_until_ready((
            _pad_to(w1, (Din, H1p)).astype(compute_dtype),
            _pad_to(b1.reshape(1, -1), (1, H1p)).astype(self.epilogue_dtype),
            _pad_to(w2, (H1p, H2p)).astype(compute_dtype),
            _pad_to(b2.reshape(1, -1), (1, H2p)).astype(self.epilogue_dtype),
            _pad_to(w3, (H2p, Doutp)).astype(compute_dtype),
            _pad_to(b3.reshape(1, -1), (1, Doutp)).astype(jnp.float32),
        ))
        self._single_buffer = True

    def __call__(self, x):
        kw = dict(out_dim=self.out_dim, compute_dtype=self.compute_dtype,
                  epilogue_dtype=self.epilogue_dtype)
        if self._single_buffer:
            try:
                return jax.block_until_ready(
                    _mlp_forward(x, *self._params, single_buffer_weights=True, **kw))
            except (pltpu.LoweringException, NotImplementedError, TypeError, ValueError):
                # Narrow fallback: pl.Buffered(1) unsupported in this JAX build; only the
                # pipeline_mode differs, so genuine bugs still surface on the retry.
                self._single_buffer = False
        return jax.block_until_ready(
            _mlp_forward(x, *self._params, single_buffer_weights=False, **kw))


def init_mlp_params(key, input_dim, hidden_dim, out_dim, dtype=jnp.float32):
    """Deterministic synthetic init matching nn.Linear shapes (stored transposed)."""
    dims = [input_dim, hidden_dim[0], hidden_dim[1], out_dim]
    params = []
    for i in range(3):
        key, kw_, kb_ = jax.random.split(key, 3)
        bound = 1.0 / (dims[i] ** 0.5)
        w = jax.random.uniform(kw_, (dims[i], dims[i + 1]), dtype, -bound, bound)
        b = jax.random.uniform(kb_, (1, dims[i + 1]), dtype, -bound, bound)
        params += [w, b]
    return params


def mlp_reference(x, w1, b1, w2, b2, w3, b3):
    h1 = jnp.maximum(x @ w1 + b1, 0.0)
    h2 = jnp.maximum(h1 @ w2 + b2, 0.0)
    return h2 @ w3 + b3


if __name__ == "__main__":
    key = jax.random.PRNGKey(0)
    B, input_dim, hidden_dim, out_dim = 512, 32, (64, 64), 16

    key, kx = jax.random.split(key)
    x = jax.random.normal(kx, (B, input_dim), jnp.float32)
    params = init_mlp_params(key, input_dim, hidden_dim, out_dim)
    ref = mlp_reference(x, *params)

    # f32 MXU operands: correctness-check path only.
    mlp_f32 = PallasMLP(params, compute_dtype=jnp.float32)
    out_f32 = mlp_f32(x)
    assert out_f32.shape == (B, out_dim) and out_f32.dtype == x.dtype
    assert jnp.allclose(out_f32, ref, atol=1e-5, rtol=1e-4), "f32 mismatch vs reference"

    # bf16 MXU operands (f32 accumulation): production path.
    mlp_bf16 = PallasMLP(params, compute_dtype=jnp.bfloat16)
    out_bf16 = mlp_bf16(x)
    assert out_bf16.shape == (B, out_dim) and out_bf16.dtype == x.dtype
    assert jnp.allclose(out_bf16, ref, atol=5e-2, rtol=5e-2), "bf16 mismatch vs reference"

    print("KERNEL_OK")
</pallas_src>

<mosaic_0001>
module attributes {stable_mosaic.version = 11 : i64} {
  func.func @_mlp_kernel(%arg0: i32, %arg1: memref<128x32xf32, #tpu.memory_space<vmem>>, %arg2: memref<32x128xf32, #tpu.memory_space<vmem>>, %arg3: memref<1x128xf32, #tpu.memory_space<vmem>>, %arg4: memref<128x128xf32, #tpu.memory_space<vmem>>, %arg5: memref<1x128xf32, #tpu.memory_space<vmem>>, %arg6: memref<128x128xf32, #tpu.memory_space<vmem>>, %arg7: memref<1x128xf32, #tpu.memory_space<vmem>>, %arg8: memref<128x128xf32, #tpu.memory_space<vmem>>) attributes {dimension_semantics = [#tpu.dimension_semantics<parallel>], iteration_bounds = array<i64: 4>, scalar_prefetch = 0 : i64, scratch_operands = 0 : i64, tpu.core_type = #tpu.core_type<tc>, window_params = [{transform_indices = @transform_0, window_bounds = array<i64: 128, 32>}, {pipeline_mode = #tpu.pipeline_mode<synchronous>, transform_indices = @transform_1, window_bounds = array<i64: 32, 128>}, {pipeline_mode = #tpu.pipeline_mode<synchronous>, transform_indices = @transform_2, window_bounds = array<i64: 1, 128>}, {pipeline_mode = #tpu.pipeline_mode<synchronous>, transform_indices = @transform_3, window_bounds = array<i64: 128, 128>}, {pipeline_mode = #tpu.pipeline_mode<synchronous>, transform_indices = @transform_4, window_bounds = array<i64: 1, 128>}, {pipeline_mode = #tpu.pipeline_mode<synchronous>, transform_indices = @transform_5, window_bounds = array<i64: 128, 128>}, {pipeline_mode = #tpu.pipeline_mode<synchronous>, transform_indices = @transform_6, window_bounds = array<i64: 1, 128>}, {transform_indices = @transform_7, window_bounds = array<i64: 128, 128>}]} {
    %c0 = arith.constant 0 : index
    %c0_0 = arith.constant 0 : index
    %0 = vector.load %arg1[%c0, %c0_0] : memref<128x32xf32, #tpu.memory_space<vmem>>, vector<128x32xf32>
    %c0_1 = arith.constant 0 : index
    %c0_2 = arith.constant 0 : index
    %1 = vector.load %arg2[%c0_1, %c0_2] : memref<32x128xf32, #tpu.memory_space<vmem>>, vector<32x128xf32>
    %cst = arith.constant dense<0.000000e+00> : vector<128x128xf32>
    %2 = tpu.matmul %0, %1, %cst {dimension_numbers = #tpu.dot_dimension_numbers<[1], [0], [0], [1], [0, 0, 1, 1], [], []>} : vector<128x32xf32>, vector<32x128xf32>, vector<128x128xf32> -> vector<128x128xf32>
    %c0_3 = arith.constant 0 : index
    %c0_4 = arith.constant 0 : index
    %3 = vector.load %arg3[%c0_3, %c0_4] : memref<1x128xf32, #tpu.memory_space<vmem>>, vector<1x128xf32>
    %4 = vector.broadcast %3 : vector<1x128xf32> to vector<128x128xf32>
    %5 = arith.addf %2, %4 : vector<128x128xf32>
    %cst_5 = arith.constant 0.000000e+00 : f32
    %6 = vector.broadcast %cst_5 : f32 to vector<128x128xf32>
    %7 = arith.maximumf %5, %6 : vector<128x128xf32>
    %c0_6 = arith.constant 0 : index
    %c0_7 = arith.constant 0 : index
    %8 = vector.load %arg4[%c0_6, %c0_7] : memref<128x128xf32, #tpu.memory_space<vmem>>, vector<128x128xf32>
    %cst_8 = arith.constant dense<0.000000e+00> : vector<128x128xf32>
    %9 = tpu.matmul %7, %8, %cst_8 {dimension_numbers = #tpu.dot_dimension_numbers<[1], [0], [0], [1], [0, 0, 1, 1], [], []>} : vector<128x128xf32>, vector<128x128xf32>, vector<128x128xf32> -> vector<128x128xf32>
    %c0_9 = arith.constant 0 : index
    %c0_10 = arith.constant 0 : index
    %10 = vector.load %arg5[%c0_9, %c0_10] : memref<1x128xf32, #tpu.memory_space<vmem>>, vector<1x128xf32>
    %11 = vector.broadcast %10 : vector<1x128xf32> to vector<128x128xf32>
    %12 = arith.addf %9, %11 : vector<128x128xf32>
    %cst_11 = arith.constant 0.000000e+00 : f32
    %13 = vector.broadcast %cst_11 : f32 to vector<128x128xf32>
    %14 = arith.maximumf %12, %13 : vector<128x128xf32>
    %c0_12 = arith.constant 0 : index
    %c0_13 = arith.constant 0 : index
    %15 = vector.load %arg6[%c0_12, %c0_13] : memref<128x128xf32, #tpu.memory_space<vmem>>, vector<128x128xf32>
    %cst_14 = arith.constant dense<0.000000e+00> : vector<128x128xf32>
    %16 = tpu.matmul %14, %15, %cst_14 {dimension_numbers = #tpu.dot_dimension_numbers<[1], [0], [0], [1], [0, 0, 1, 1], [], []>} : vector<128x128xf32>, vector<128x128xf32>, vector<128x128xf32> -> vector<128x128xf32>
    %c0_15 = arith.constant 0 : index
    %c0_16 = arith.constant 0 : index
    %17 = vector.load %arg7[%c0_15, %c0_16] : memref<1x128xf32, #tpu.memory_space<vmem>>, vector<1x128xf32>
    %18 = vector.broadcast %17 : vector<1x128xf32> to vector<128x128xf32>
    %19 = arith.addf %16, %18 : vector<128x128xf32>
    %c0_17 = arith.constant 0 : index
    %c0_18 = arith.constant 0 : index
    %20 = vector.load %arg8[%c0_17, %c0_18] : memref<128x128xf32, #tpu.memory_space<vmem>>, vector<128x128xf32>
    tpu.vector_store %arg8[%c0_17, %c0_18], %19 {strides = array<i32>} : memref<128x128xf32, #tpu.memory_space<vmem>>, vector<128x128xf32>,
    return
  }
  func.func @transform_0(%arg0: i32) -> (i32, i32) {
    %c0_i32 = arith.constant 0 : i32
    %c0_i32_0 = arith.constant 0 : i32
    return %arg0, %c0_i32 : i32, i32
  }
  func.func @transform_1(%arg0: i32) -> (i32, i32) {
    %c0_i32 = arith.constant 0 : i32
    %c0_i32_0 = arith.constant 0 : i32
    %c0_i32_1 = arith.constant 0 : i32
    return %c0_i32, %c0_i32_0 : i32, i32
  }
  func.func @transform_2(%arg0: i32) -> (i32, i32) {
    %c0_i32 = arith.constant 0 : i32
    %c0_i32_0 = arith.constant 0 : i32
    %c0_i32_1 = arith.constant 0 : i32
    return %c0_i32, %c0_i32_0 : i32, i32
  }
  func.func @transform_3(%arg0: i32) -> (i32, i32) {
    %c0_i32 = arith.constant 0 : i32
    %c0_i32_0 = arith.constant 0 : i32
    %c0_i32_1 = arith.constant 0 : i32
    return %c0_i32, %c0_i32_0 : i32, i32
  }
  func.func @transform_4(%arg0: i32) -> (i32, i32) {
    %c0_i32 = arith.constant 0 : i32
    %c0_i32_0 = arith.constant 0 : i32
    %c0_i32_1 = arith.constant 0 : i32
    return %c0_i32, %c0_i32_0 : i32, i32
  }
  func.func @transform_5(%arg0: i32) -> (i32, i32) {
    %c0_i32 = arith.constant 0 : i32
    %c0_i32_0 = arith.constant 0 : i32
    %c0_i32_1 = arith.constant 0 : i32
    return %c0_i32, %c0_i32_0 : i32, i32
  }
  func.func @transform_6(%arg0: i32) -> (i32, i32) {
    %c0_i32 = arith.constant 0 : i32
    %c0_i32_0 = arith.constant 0 : i32
    %c0_i32_1 = arith.constant 0 : i32
    return %c0_i32, %c0_i32_0 : i32, i32
  }
  func.func @transform_7(%arg0: i32) -> (i32, i32) {
    %c0_i32 = arith.constant 0 : i32
    %c0_i32_0 = arith.constant 0 : i32
    return %arg0, %c0_i32 : i32, i32
  }
}

</mosaic_0001>

<llo_original>
// kernel: _mlp_forward.1
$region0: #{_mlp_forward.1}
  #allocation0 [shape = 'u32[]', space=smem, size = 0x4, offset = 0x4, fixed_abs, tag = 'smem constant byte address 0x4 - core index']
  #allocation1 [shape = 'u32[72,128]{1,0:T(1,128)}', space=vmem, size = 0x9000, scoped, tag = 'internal scratch']
  %s0 = inlined_call_operand.vmem [shape: f32[512,32], index: 0, kind: input, shape index: {}]
  %s1 = inlined_call_operand.vmem [shape: f32[32,128], index: 1, kind: input, shape index: {}]
  %s2 = inlined_call_operand.vmem [shape: f32[1,128], index: 2, kind: input, shape index: {}]
  %s3 = inlined_call_operand.vmem [shape: f32[128,128], index: 3, kind: input, shape index: {}]
  %s4 = inlined_call_operand.vmem [shape: f32[1,128], index: 4, kind: input, shape index: {}]
  %s5 = inlined_call_operand.vmem [shape: f32[128,128], index: 5, kind: input, shape index: {}]
  %s6 = inlined_call_operand.vmem [shape: f32[1,128], index: 6, kind: input, shape index: {}]
  %s7 = inlined_call_operand.vmem [shape: f32[512,128], index: 7, kind: output, shape index: {}]
  %s8 = sld [smem:[#allocation0]]
  $region61: #{_mlp_forward.1} parent=0
    _
  %s10 = ssub.s32 1, %s8
  %s11 = scalar_select 0, %s10, %s8
  loop: start=0, step=1, limit=6
  $region2: #{_mlp_forward.1} parent=0 // loop_pre_header
    _
  $region3: #{_mlp_forward.1} parent=0 // loop_header
    %s13 = sphi 0, %s17
    %p14 = scmp.ge.s32.totalorder %s13, 6
    %s23 = sphi 0, %s25
    %s26 = sphi 0, %s23
    %s27 = sphi 0, %s26
    %s43 = sphi 0, %s27
    %s47 = sphi 0, %s47
    %s49 = sphi 0, %s47
    %s50 = sphi 0, %s49
    %s64 = sphi 0, %s50
    %s68 = sphi 0, %s68
    %s70 = sphi 0, %s68
    %s71 = sphi 0, %s70
    %s85 = sphi 0, %s71
    %s89 = sphi 0, %s89
    %s91 = sphi 0, %s89
    %s92 = sphi 0, %s91
    %s106 = sphi 0, %s92
    %s110 = sphi 0, %s110
    %s112 = sphi 0, %s110
    %s113 = sphi 0, %s112
    %s127 = sphi 0, %s113
    %s131 = sphi 0, %s131
    %s133 = sphi 0, %s131
    %s134 = sphi 0, %s133
    %s148 = sphi 0, %s134
    %s152 = sphi 0, %s152
    %s154 = sphi 0, %s152
    %s155 = sphi 0, %s154
    %s169 = sphi 0, %s155
    %s175 = sphi 0, %s177
    %s178 = sphi 0, %s175
    %s179 = sphi 0, %s178
    %s195 = sphi 0, %s179
  $region4: #{_mlp_forward.1} parent=0 // loop_header_branch
    %16 = sbr.rel (%p14) target = $region8
  $region5: #{_mlp_forward.1} parent=0 // loop_body
    %s18 = ssub.s32 %s13, 1
    %s19 = ssub.s32 %s13, 2
    %s20 = sadd.s32 %s13, 1
    %s21 = ssub.s32 %s13, %s20
    %p22 = scmp.eq.s32.totalorder %s21, 0
    %s24 = sadd.s32 %s23, 1
    %s25 = scalar_select %p22, %s23, %s24
    %p28 = pneg %p22
    %p29 = scmp.eq.s32.totalorder %s13, 3
    %p30 = por %p28, %p29
    %p31 = scmp.ne.s32.totalorder %s23, %s26
    %p32 = scmp.eq.s32.totalorder %s13, 0
    %p33 = por %p31, %p32
    %p34 = scmp.ne.s32.totalorder %s23, %s26
    %p35 = scmp.eq.s32.totalorder %s18, 3
    %p36 = por %p34, %p35
    %p37 = scmp.ne.s32.totalorder %s26, %s27
    %p38 = scmp.eq.s32.totalorder %s18, 0
    %p39 = por %p37, %p38
    %p40 = scmp.ne.s32.totalorder %s26, %s27
    %p41 = scmp.eq.s32.totalorder %s19, 3
    %p42 = por %p40, %p41
    %p44 = scmp.ne.s32.totalorder %s27, %s43
    %p45 = scmp.eq.s32.totalorder %s19, 0
    %p46 = por %p44, %p45
    %s48 = sadd.s32 %s47, 1
    %p51 = scmp.eq.s32.totalorder %s13, 3
    %p52 = scmp.ne.s32.totalorder %s47, %s49
    %p53 = scmp.eq.s32.totalorder %s13, 0
    %p54 = por %p52, %p53
    %p55 = scmp.ne.s32.totalorder %s47, %s49
    %p56 = scmp.eq.s32.totalorder %s18, 3
    %p57 = por %p55, %p56
    %p58 = scmp.ne.s32.totalorder %s49, %s50
    %p59 = scmp.eq.s32.totalorder %s18, 0
    %p60 = por %p58, %p59
    %p61 = scmp.ne.s32.totalorder %s49, %s50
    %p62 = scmp.eq.s32.totalorder %s19, 3
    %p63 = por %p61, %p62
    %p65 = scmp.ne.s32.totalorder %s50, %s64
    %p66 = scmp.eq.s32.totalorder %s19, 0
    %p67 = por %p65, %p66
    %s69 = sadd.s32 %s68, 1
    %p72 = scmp.eq.s32.totalorder %s13, 3
    %p73 = scmp.ne.s32.totalorder %s68, %s70
    %p74 = scmp.eq.s32.totalorder %s13, 0
    %p75 = por %p73, %p74
    %p76 = scmp.ne.s32.totalorder %s68, %s70
    %p77 = scmp.eq.s32.totalorder %s18, 3
    %p78 = por %p76, %p77
    %p79 = scmp.ne.s32.totalorder %s70, %s71
    %p80 = scmp.eq.s32.totalorder %s18, 0
    %p81 = por %p79, %p80
    %p82 = scmp.ne.s32.totalorder %s70, %s71
    %p83 = scmp.eq.s32.totalorder %s19, 3
    %p84 = por %p82, %p83
    %p86 = scmp.ne.s32.totalorder %s71, %s85
    %p87 = scmp.eq.s32.totalorder %s19, 0
    %p88 = por %p86, %p87
    %s90 = sadd.s32 %s89, 1
    %p93 = scmp.eq.s32.totalorder %s13, 3
    %p94 = scmp.ne.s32.totalorder %s89, %s91
    %p95 = scmp.eq.s32.totalorder %s13, 0
    %p96 = por %p94, %p95
    %p97 = scmp.ne.s32.totalorder %s89, %s91
    %p98 = scmp.eq.s32.totalorder %s18, 3
    %p99 = por %p97, %p98
    %p100 = scmp.ne.s32.totalorder %s91, %s92
    %p101 = scmp.eq.s32.totalorder %s18, 0
    %p102 = por %p100, %p101
    %p103 = scmp.ne.s32.totalorder %s91, %s92
    %p104 = scmp.eq.s32.totalorder %s19, 3
    %p105 = por %p103, %p104
    %p107 = scmp.ne.s32.totalorder %s92, %s106
    %p108 = scmp.eq.s32.totalorder %s19, 0
    %p109 = por %p107, %p108
    %s111 = sadd.s32 %s110, 1
    %p114 = scmp.eq.s32.totalorder %s13, 3
    %p115 = scmp.ne.s32.totalorder %s110, %s112
    %p116 = scmp.eq.s32.totalorder %s13, 0
    %p117 = por %p115, %p116
    %p118 = scmp.ne.s32.totalorder %s110, %s112
    %p119 = scmp.eq.s32.totalorder %s18, 3
    %p120 = por %p118, %p119
    %p121 = scmp.ne.s32.totalorder %s112, %s113
    %p122 = scmp.eq.s32.totalorder %s18, 0
    %p123 = por %p121, %p122
    %p124 = scmp.ne.s32.totalorder %s112, %s113
    %p125 = scmp.eq.s32.totalorder %s19, 3
    %p126 = por %p124, %p125
    %p128 = scmp.ne.s32.totalorder %s113, %s127
    %p129 = scmp.eq.s32.totalorder %s19, 0
    %p130 = por %p128, %p129
    %s132 = sadd.s32 %s131, 1
    %p135 = scmp.eq.s32.totalorder %s13, 3
    %p136 = scmp.ne.s32.totalorder %s131, %s133
    %p137 = scmp.eq.s32.totalorder %s13, 0
    %p138 = por %p136, %p137
    %p139 = scmp.ne.s32.totalorder %s131, %s133
    %p140 = scmp.eq.s32.totalorder %s18, 3
    %p141 = por %p139, %p140
    %p142 = scmp.ne.s32.totalorder %s133, %s134
    %p143 = scmp.eq.s32.totalorder %s18, 0
    %p144 = por %p142, %p143
    %p145 = scmp.ne.s32.totalorder %s133, %s134
    %p146 = scmp.eq.s32.totalorder %s19, 3
    %p147 = por %p145, %p146
    %p149 = scmp.ne.s32.totalorder %s134, %s148
    %p150 = scmp.eq.s32.totalorder %s19, 0
    %p151 = por %p149, %p150
    %s153 = sadd.s32 %s152, 1
    %p156 = scmp.eq.s32.totalorder %s13, 3
    %p157 = scmp.ne.s32.totalorder %s152, %s154
    %p158 = scmp.eq.s32.totalorder %s13, 0
    %p159 = por %p157, %p158
    %p160 = scmp.ne.s32.totalorder %s152, %s154
    %p161 = scmp.eq.s32.totalorder %s18, 3
    %p162 = por %p160, %p161
    %p163 = scmp.ne.s32.totalorder %s154, %s155
    %p164 = scmp.eq.s32.totalorder %s18, 0
    %p165 = por %p163, %p164
    %p166 = scmp.ne.s32.totalorder %s154, %s155
    %p167 = scmp.eq.s32.totalorder %s19, 3
    %p168 = por %p166, %p167
    %p170 = scmp.ne.s32.totalorder %s155, %s169
    %p171 = scmp.eq.s32.totalorder %s19, 0
    %p172 = por %p170, %p171
    %s173 = ssub.s32 %s13, %s20
    %p174 = scmp.eq.s32.totalorder %s173, 0
    %s176 = sadd.s32 %s175, 1
    %s177 = scalar_select %p174, %s175, %s176
    %p180 = pneg %p174
    %p181 = scmp.eq.s32.totalorder %s13, 3
    %p182 = por %p180, %p181
    %p183 = scmp.ne.s32.totalorder %s175, %s178
    %p184 = scmp.eq.s32.totalorder %s13, 0
    %p185 = por %p183, %p184
    %p186 = scmp.ne.s32.totalorder %s175, %s178
    %p187 = scmp.eq.s32.totalorder %s18, 3
    %p188 = por %p186, %p187
    %p189 = scmp.ne.s32.totalorder %s178, %s179
    %p190 = scmp.eq.s32.totalorder %s18, 0
    %p191 = por %p189, %p190
    %p192 = scmp.ne.s32.totalorder %s178, %s179
    %p193 = scmp.eq.s32.totalorder %s19, 3
    %p194 = por %p192, %p193
    %p196 = scmp.ne.s32.totalorder %s179, %s195
    %p197 = scmp.eq.s32.totalorder %s19, 0
    %p198 = por %p196, %p197
    %p199 = scmp.le.s32.totalorder 1, %s13
    %p200 = scmp.lt.s32.totalorder %s13, 5
    %p201 = pnand %p199, %p200
    %p202 = pneg %p201
    // Predicated region
    $region9: #{_mlp_forward.1} parent=5 // pred_check
      _
    $region10: #{_mlp_forward.1} parent=5 // pred_check_branch
      %204 = sbr.rel (%p201) target = $region12
    $region11: #{_mlp_forward.1} parent=5 // pred_region
      %s205 = ssub.s32 %s13, 1
      // Predicated region
      $region13: #{_mlp_forward.1} parent=11 // pred_check
        %p206 = pneg %p60
      $region14: #{_mlp_forward.1} parent=11 // pred_check_branch
        %208 = sbr.rel (%p206) target = $region16
      $region15: #{_mlp_forward.1} parent=11 // pred_region
        _
      $region16: #{_mlp_forward.1} parent=11 // pred_fallthru
        _
      // Predicated region
      $region17: #{_mlp_forward.1} parent=11 // pred_check
        %p209 = pneg %p81
      $region18: #{_mlp_forward.1} parent=11 // pred_check_branch
        %211 = sbr.rel (%p209) target = $region20
      $region19: #{_mlp_forward.1} parent=11 // pred_region
        _
      $region20: #{_mlp_forward.1} parent=11 // pred_fallthru
        _
      // Predicated region
      $region21: #{_mlp_forward.1} parent=11 // pred_check
        %p212 = pneg %p102
      $region22: #{_mlp_forward.1} parent=11 // pred_check_branch
        %214 = sbr.rel (%p212) target = $region24
      $region23: #{_mlp_forward.1} parent=11 // pred_region
        _
      $region24: #{_mlp_forward.1} parent=11 // pred_fallthru
        _
      // Predicated region
      $region25: #{_mlp_forward.1} parent=11 // pred_check
        %p215 = pneg %p123
      $region26: #{_mlp_forward.1} parent=11 // pred_check_branch
        %217 = sbr.rel (%p215) target = $region28
      $region27: #{_mlp_forward.1} parent=11 // pred_region
        _
      $region28: #{_mlp_forward.1} parent=11 // pred_fallthru
        _
      // Predicated region
      $region29: #{_mlp_forward.1} parent=11 // pred_check
        %p218 = pneg %p144
      $region30: #{_mlp_forward.1} parent=11 // pred_check_branch
        %220 = sbr.rel (%p218) target = $region32
      $region31: #{_mlp_forward.1} parent=11 // pred_region
        _
      $region32: #{_mlp_forward.1} parent=11 // pred_fallthru
        _
      // Predicated region
      $region33: #{_mlp_forward.1} parent=11 // pred_check
        %p221 = pneg %p165
      $region34: #{_mlp_forward.1} parent=11 // pred_check_branch
        %223 = sbr.rel (%p221) target = $region36
      $region35: #{_mlp_forward.1} parent=11 // pred_region
        _
      $region36: #{_mlp_forward.1} parent=11 // pred_fallthru
        _
    $region12: #{_mlp_forward.1} parent=5 // pred_fallthru
      _
    %p224 = scmp.lt.s32.totalorder %s13, 4
    // Predicated region
    $region37: #{_mlp_forward.1} parent=5 // pred_check
      %p225 = pneg %p224
    $region38: #{_mlp_forward.1} parent=5 // pred_check_branch
      %227 = sbr.rel (%p225) target = $region40
    $region39: #{_mlp_forward.1} parent=5 // pred_region
      // Predicated region
      $region41: #{_mlp_forward.1} parent=39 // pred_check
        %p228 = pneg %p33
      $region42: #{_mlp_forward.1} parent=39 // pred_check_branch
        %230 = sbr.rel (%p228) target = $region44
      $region43: #{_mlp_forward.1} parent=39 // pred_region
        %s231 = smul.u32 16, %s13
        %p232 = scmp.lt.s32.totalorder %s231, 63
        %s233 = scalar_select %p232, %s231, 63
        %s234 = smul.addr %s233, 8
        %s235 = scalar_lea.vmem %s0, %s234
        %s236 = smul.u32 16, %s13
      $region44: #{_mlp_forward.1} parent=39 // pred_fallthru
        _
    $region40: #{_mlp_forward.1} parent=5 // pred_fallthru
      _
    %p237 = scmp.le.s32.totalorder 1, %s13
    %p238 = scmp.lt.s32.totalorder %s13, 5
    %p239 = pnand %p237, %p238
    %p240 = pneg %p239
    // Predicated region
    $region45: #{_mlp_forward.1} parent=5 // pred_check
      _
    $region46: #{_mlp_forward.1} parent=5 // pred_check_branch
      %242 = sbr.rel (%p239) target = $region48
    $region47: #{_mlp_forward.1} parent=5 // pred_region
      %s243 = ssub.s32 %s13, 1
      %s244 = smul.u32 16, %s18
      %p245 = scmp.lt.s32.totalorder %s244, 63
      %s246 = scalar_select %p245, %s244, 63
      %s247 = smul.addr %s246, 8
      %s248 = scalar_lea.vmem %s0, %s247
      %p249 = pneg %p39
      %p250 = pneg %p36
      %p251 = pneg %p60
      %p252 = pneg %p57
      %p253 = pneg %p81
      %p254 = pneg %p78
      %p255 = pneg %p102
      %p256 = pneg %p99
      %p257 = pneg %p123
      %p258 = pneg %p120
      %p259 = pneg %p144
      %p260 = pneg %p141
      %p261 = pneg %p165
      %p262 = pneg %p162
      %p263 = pneg %p191
      %p264 = pneg %p188
      %s265 = smul.u32 16, %s18
      %p266 = scmp.lt.s32.totalorder %s265, 63
      %s267 = scalar_select %p266, %s265, 63
      %s268 = smul.addr %s267, 8
      %s269 = scalar_lea.vmem %s7, %s268
      %s270 = smul.u32 16, %s18
      %p271 = scmp.lt.s32.totalorder %s270, 63
      %s272 = scalar_select %p271, %s270, 63
      %s273 = smul.addr %s272, 8
      %s274 = scalar_lea.vmem %s0, %s273
      %s275 = smul.u32 16, %s18
      %s276 = smul.u32 16, %s18
      %p277 = scmp.lt.s32.totalorder %s276, 63
      %s278 = scalar_select %p277, %s276, 63
      %s279 = smul.addr %s278, 8
      %s280 = scalar_lea.vmem %s7, %s279
      %s281 = smul.u32 16, %s18
      %v282 = vld [vmem:[%s274] sm:$0xff]
      %v283 = vld [vmem:[%s274 + $0x8] sm:$0xff]
      %v284 = vld [vmem:[%s274 + $0x10] sm:$0xff]
      %v285 = vld [vmem:[%s274 + $0x18] sm:$0xff]
      %v286 = vld [vmem:[%s274 + $0x20] sm:$0xff]
      %v287 = vld [vmem:[%s274 + $0x28] sm:$0xff]
      %v288 = vld [vmem:[%s274 + $0x30] sm:$0xff]
      %v289 = vld [vmem:[%s274 + $0x38] sm:$0xff]
      %v290 = vld [vmem:[%s274 + $0x40] sm:$0xff]
      %v291 = vld [vmem:[%s274 + $0x48] sm:$0xff]
      %v292 = vld [vmem:[%s274 + $0x50] sm:$0xff]
      %v293 = vld [vmem:[%s274 + $0x58] sm:$0xff]
      %v294 = vld [vmem:[%s274 + $0x60] sm:$0xff]
      %v295 = vld [vmem:[%s274 + $0x68] sm:$0xff]
      %v296 = vld [vmem:[%s274 + $0x70] sm:$0xff]
      %v297 = vld [vmem:[%s274 + $0x78] sm:$0xff]
      %v298 = vld [vmem:[%s1] sm:$0xff]
      %v299 = vld [vmem:[%s1 + $0x8] sm:$0xff]
      %v300 = vld [vmem:[%s1 + $0x10] sm:$0xff]
      %v301 = vld [vmem:[%s1 + $0x18] sm:$0xff]
      %v302 = vld [vmem:[%s2] sm:$0x1]
      %v304 = vperm.slane %v302, 0
      %vm306 = vcmask 261120
      %v308 = vsel %vm306, %v282, 0
      %v311 = vsel %vm306, %v283, 0
      %v314 = vsel %vm306, %v284, 0
      %v317 = vsel %vm306, %v285, 0
      %v320 = vsel %vm306, %v286, 0
      %v323 = vsel %vm306, %v287, 0
      %v326 = vsel %vm306, %v288, 0
      %v329 = vsel %vm306, %v289, 0
      %v332 = vsel %vm306, %v290, 0
      %v335 = vsel %vm306, %v291, 0
      %v338 = vsel %vm306, %v292, 0
      %v341 = vsel %vm306, %v293, 0
      %v344 = vsel %vm306, %v294, 0
      %v347 = vsel %vm306, %v295, 0
      %v350 = vsel %vm306, %v296, 0
      %v353 = vsel %vm306, %v297, 0
      %355 = vmatpush.msra.mxu0 0.0
      %356 = vmatpush.msra.mxu0 0.0
      %357 = vmatpush.msra.mxu0 0.0
      %358 = vmatpush.msra.mxu0 0.0
      %359 = vmatpush.msra.mxu0 0.0
      %360 = vmatpush.msra.mxu0 0.0
      %361 = vmatpush.msra.mxu0 0.0
      %362 = vmatpush.msra.mxu0 0.0
      %363 = vmatpush.msra.mxu0 0.0
      %364 = vmatpush.msra.mxu0 0.0
      %365 = vmatpush.msra.mxu0 0.0
      %366 = vmatpush.msra.mxu0 0.0
      %367 = vmatpush.msra.mxu0 %v301
      %368 = vmatpush.msra.mxu0 %v300
      %369 = vmatpush.msra.mxu0 %v299
      %370 = vmatpush.msra.mxu0 %v298
      %371 = vmatmul.f32.gmra.mxu0 %v308
      %v372 = vpop.f32.mrf.mxu0
      %v373 = vadd.f32 %v304, %v372
      %374 = vmatmul.f32.gmra.mxu0 %v311
      %v375 = vpop.f32.mrf.mxu0
      %v376 = vadd.f32 %v304, %v375
      %377 = vmatmul.f32.gmra.mxu0 %v314
      %v378 = vpop.f32.mrf.mxu0
      %v379 = vadd.f32 %v304, %v378
      %380 = vmatmul.f32.gmra.mxu0 %v317
      %v381 = vpop.f32.mrf.mxu0
      %v382 = vadd.f32 %v304, %v381
      %383 = vmatmul.f32.gmra.mxu0 %v320
      %v384 = vpop.f32.mrf.mxu0
      %v385 = vadd.f32 %v304, %v384
      %386 = vmatmul.f32.gmra.mxu0 %v323
      %v387 = vpop.f32.mrf.mxu0
      %v388 = vadd.f32 %v304, %v387
      %389 = vmatmul.f32.gmra.mxu0 %v326
      %v390 = vpop.f32.mrf.mxu0
      %v391 = vadd.f32 %v304, %v390
      %392 = vmatmul.f32.gmra.mxu0 %v329
      %v393 = vpop.f32.mrf.mxu0
      %v394 = vadd.f32 %v304, %v393
      %395 = vmatmul.f32.gmra.mxu0 %v332
      %v396 = vpop.f32.mrf.mxu0
      %v397 = vadd.f32 %v304, %v396
      %398 = vmatmul.f32.gmra.mxu0 %v335
      %v399 = vpop.f32.mrf.mxu0
      %v400 = vadd.f32 %v304, %v399
      %401 = vmatmul.f32.gmra.mxu0 %v338
      %v402 = vpop.f32.mrf.mxu0
      %v403 = vadd.f32 %v304, %v402
      %404 = vmatmul.f32.gmra.mxu0 %v341
      %v405 = vpop.f32.mrf.mxu0
      %v406 = vadd.f32 %v304, %v405
      %407 = vmatmul.f32.gmra.mxu0 %v344
      %v408 = vpop.f32.mrf.mxu0
      %v409 = vadd.f32 %v304, %v408
      %410 = vmatmul.f32.gmra.mxu0 %v347
      %v411 = vpop.f32.mrf.mxu0
      %v412 = vadd.f32 %v304, %v411
      %413 = vmatmul.f32.gmra.mxu0 %v350
      %v414 = vpop.f32.mrf.mxu0
      %v415 = vadd.f32 %v304, %v414
      %416 = vmatmul.f32.gmra.mxu0 %v353
      %v417 = vpop.f32.mrf.mxu0
      %v418 = vadd.f32 %v304, %v417
      %419 = vdwg.mxu0
      %v420 = vmax.f32 %v373, 0.0
      %v421 = vmax.f32 %v376, 0.0
      %v422 = vmax.f32 %v379, 0.0
      %v423 = vmax.f32 %v382, 0.0
      %v424 = vmax.f32 %v385, 0.0
      %v425 = vmax.f32 %v388, 0.0
      %v426 = vmax.f32 %v391, 0.0
      %v427 = vmax.f32 %v394, 0.0
      %v428 = vmax.f32 %v397, 0.0
      %v429 = vmax.f32 %v400, 0.0
      %v430 = vmax.f32 %v403, 0.0
      %v431 = vmax.f32 %v406, 0.0
      %v432 = vmax.f32 %v409, 0.0
      %v433 = vmax.f32 %v412, 0.0
      %v434 = vmax.f32 %v415, 0.0
      %v435 = vmax.f32 %v418, 0.0
      %v436 = vld [vmem:[%s3] sm:$0xff]
      %v437 = vld [vmem:[%s3 + $0x8] sm:$0xff]
      %v438 = vld [vmem:[%s3 + $0x10] sm:$0xff]
      %v439 = vld [vmem:[%s3 + $0x18] sm:$0xff]
      %v440 = vld [vmem:[%s3 + $0x20] sm:$0xff]
      %v441 = vld [vmem:[%s3 + $0x28] sm:$0xff]
      %v442 = vld [vmem:[%s3 + $0x30] sm:$0xff]
      %v443 = vld [vmem:[%s3 + $0x38] sm:$0xff]
      %v444 = vld [vmem:[%s3 + $0x40] sm:$0xff]
      %v445 = vld [vmem:[%s3 + $0x48] sm:$0xff]
      %v446 = vld [vmem:[%s3 + $0x50] sm:$0xff]
      %v447 = vld [vmem:[%s3 + $0x58] sm:$0xff]
      %v448 = vld [vmem:[%s3 + $0x60] sm:$0xff]
      %v449 = vld [vmem:[%s3 + $0x68] sm:$0xff]
      %v450 = vld [vmem:[%s3 + $0x70] sm:$0xff]
      %v451 = vld [vmem:[%s3 + $0x78] sm:$0xff]
      %v452 = vld [vmem:[%s4] sm:$0x1]
      %v454 = vperm.slane %v452, 0
      %456 = vmatpush.msra.mxu0 %v451
      %457 = vmatpush.msra.mxu0 %v450
      %458 = vmatpush.msra.mxu0 %v449
      %459 = vmatpush.msra.mxu0 %v448
      %460 = vmatpush.msra.mxu0 %v447
      %461 = vmatpush.msra.mxu0 %v446
      %462 = vmatpush.msra.mxu0 %v445
      %463 = vmatpush.msra.mxu0 %v444
      %464 = vmatpush.msra.mxu0 %v443
      %465 = vmatpush.msra.mxu0 %v442
      %466 = vmatpush.msra.mxu0 %v441
      %467 = vmatpush.msra.mxu0 %v440
      %468 = vmatpush.msra.mxu0 %v439
      %469 = vmatpush.msra.mxu0 %v438
      %470 = vmatpush.msra.mxu0 %v437
      %471 = vmatpush.msra.mxu0 %v436
      %472 = vmatmul.f32.gmra.mxu0 %v420
      %v473 = vpop.f32.mrf.mxu0
      %v474 = vadd.f32 %v454, %v473
      %475 = vmatmul.f32.gmra.mxu0 %v421
      %v476 = vpop.f32.mrf.mxu0
      %v477 = vadd.f32 %v454, %v476
      %478 = vmatmul.f32.gmra.mxu0 %v422
      %v479 = vpop.f32.mrf.mxu0
      %v480 = vadd.f32 %v454, %v479
      %481 = vmatmul.f32.gmra.mxu0 %v423
      %v482 = vpop.f32.mrf.mxu0
      %v483 = vadd.f32 %v454, %v482
      %484 = vmatmul.f32.gmra.mxu0 %v424
      %v485 = vpop.f32.mrf.mxu0
      %v486 = vadd.f32 %v454, %v485
      %487 = vmatmul.f32.gmra.mxu0 %v425
      %v488 = vpop.f32.mrf.mxu0
      %v489 = vadd.f32 %v454, %v488
      %490 = vmatmul.f32.gmra.mxu0 %v426
      %v491 = vpop.f32.mrf.mxu0
      %v492 = vadd.f32 %v454, %v491
      %493 = vmatmul.f32.gmra.mxu0 %v427
      %v494 = vpop.f32.mrf.mxu0
      %v495 = vadd.f32 %v454, %v494
      %496 = vmatmul.f32.gmra.mxu0 %v428
      %v497 = vpop.f32.mrf.mxu0
      %v498 = vadd.f32 %v454, %v497
      %499 = vmatmul.f32.gmra.mxu0 %v429
      %v500 = vpop.f32.mrf.mxu0
      %v501 = vadd.f32 %v454, %v500
      %502 = vmatmul.f32.gmra.mxu0 %v430
      %v503 = vpop.f32.mrf.mxu0
      %v504 = vadd.f32 %v454, %v503
      %505 = vmatmul.f32.gmra.mxu0 %v431
      %v506 = vpop.f32.mrf.mxu0
      %v507 = vadd.f32 %v454, %v506
      %508 = vmatmul.f32.gmra.mxu0 %v432
      %v509 = vpop.f32.mrf.mxu0
      %v510 = vadd.f32 %v454, %v509
      %511 = vmatmul.f32.gmra.mxu0 %v433
      %v512 = vpop.f32.mrf.mxu0
      %v513 = vadd.f32 %v454, %v512
      %514 = vmatmul.f32.gmra.mxu0 %v434
      %v515 = vpop.f32.mrf.mxu0
      %v516 = vadd.f32 %v454, %v515
      %517 = vmatmul.f32.gmra.mxu0 %v435
      %v518 = vpop.f32.mrf.mxu0
      %v519 = vadd.f32 %v454, %v518
      %520 = vdwg.mxu0
      %v521 = vmax.f32 %v474, 0.0
      %v522 = vmax.f32 %v477, 0.0
      %v523 = vmax.f32 %v480, 0.0
      %v524 = vmax.f32 %v483, 0.0
      %v525 = vmax.f32 %v486, 0.0
      %v526 = vmax.f32 %v489, 0.0
      %v527 = vmax.f32 %v492, 0.0
      %v528 = vmax.f32 %v495, 0.0
      %v529 = vmax.f32 %v498, 0.0
      %v530 = vmax.f32 %v501, 0.0
      %v531 = vmax.f32 %v504, 0.0
      %v532 = vmax.f32 %v507, 0.0
      %v533 = vmax.f32 %v510, 0.0
      %v534 = vmax.f32 %v513, 0.0
      %v535 = vmax.f32 %v516, 0.0
      %v536 = vmax.f32 %v519, 0.0
      %v537 = vld [vmem:[%s5] sm:$0xff]
      %v538 = vld [vmem:[%s5 + $0x8] sm:$0xff]
      %v539 = vld [vmem:[%s5 + $0x10] sm:$0xff]
      %v540 = vld [vmem:[%s5 + $0x18] sm:$0xff]
      %v541 = vld [vmem:[%s5 + $0x20] sm:$0xff]
      %v542 = vld [vmem:[%s5 + $0x28] sm:$0xff]
      %v543 = vld [vmem:[%s5 + $0x30] sm:$0xff]
      %v544 = vld [vmem:[%s5 + $0x38] sm:$0xff]
      %v545 = vld [vmem:[%s5 + $0x40] sm:$0xff]
      %v546 = vld [vmem:[%s5 + $0x48] sm:$0xff]
      %v547 = vld [vmem:[%s5 + $0x50] sm:$0xff]
      %v548 = vld [vmem:[%s5 + $0x58] sm:$0xff]
      %v549 = vld [vmem:[%s5 + $0x60] sm:$0xff]
      %v550 = vld [vmem:[%s5 + $0x68] sm:$0xff]
      %v551 = vld [vmem:[%s5 + $0x70] sm:$0xff]
      %v552 = vld [vmem:[%s5 + $0x78] sm:$0xff]
      %v553 = vld [vmem:[%s6] sm:$0x1]
      %v555 = vperm.slane %v553, 0
      %557 = vmatpush.msra.mxu0 %v552
      %558 = vmatpush.msra.mxu0 %v551
      %559 = vmatpush.msra.mxu0 %v550
      %560 = vmatpush.msra.mxu0 %v549
      %561 = vmatpush.msra.mxu0 %v548
      %562 = vmatpush.msra.mxu0 %v547
      %563 = vmatpush.msra.mxu0 %v546
      %564 = vmatpush.msra.mxu0 %v545
      %565 = vmatpush.msra.mxu0 %v544
      %566 = vmatpush.msra.mxu0 %v543
      %567 = vmatpush.msra.mxu0 %v542
      %568 = vmatpush.msra.mxu0 %v541
      %569 = vmatpush.msra.mxu0 %v540
      %570 = vmatpush.msra.mxu0 %v539
      %571 = vmatpush.msra.mxu0 %v538
      %572 = vmatpush.msra.mxu0 %v537
      %573 = vmatmul.f32.gmra.mxu0 %v521
      %v574 = vpop.f32.mrf.mxu0
      %v575 = vadd.f32 %v555, %v574
      %576 = vmatmul.f32.gmra.mxu0 %v522
      %v577 = vpop.f32.mrf.mxu0
      %v578 = vadd.f32 %v555, %v577
      %579 = vmatmul.f32.gmra.mxu0 %v523
      %v580 = vpop.f32.mrf.mxu0
      %v581 = vadd.f32 %v555, %v580
      %582 = vmatmul.f32.gmra.mxu0 %v524
      %v583 = vpop.f32.mrf.mxu0
      %v584 = vadd.f32 %v555, %v583
      %585 = vmatmul.f32.gmra.mxu0 %v525
      %v586 = vpop.f32.mrf.mxu0
      %v587 = vadd.f32 %v555, %v586
      %588 = vmatmul.f32.gmra.mxu0 %v526
      %v589 = vpop.f32.mrf.mxu0
      %v590 = vadd.f32 %v555, %v589
      %591 = vmatmul.f32.gmra.mxu0 %v527
      %v592 = vpop.f32.mrf.mxu0
      %v593 = vadd.f32 %v555, %v592
      %594 = vmatmul.f32.gmra.mxu0 %v528
      %v595 = vpop.f32.mrf.mxu0
      %v596 = vadd.f32 %v555, %v595
      %597 = vmatmul.f32.gmra.mxu0 %v529
      %v598 = vpop.f32.mrf.mxu0
      %v599 = vadd.f32 %v555, %v598
      %600 = vmatmul.f32.gmra.mxu0 %v530
      %v601 = vpop.f32.mrf.mxu0
      %v602 = vadd.f32 %v555, %v601
      %603 = vmatmul.f32.gmra.mxu0 %v531
      %v604 = vpop.f32.mrf.mxu0
      %v605 = vadd.f32 %v555, %v604
      %606 = vmatmul.f32.gmra.mxu0 %v532
      %v607 = vpop.f32.mrf.mxu0
      %v608 = vadd.f32 %v555, %v607
      %609 = vmatmul.f32.gmra.mxu0 %v533
      %v610 = vpop.f32.mrf.mxu0
      %v611 = vadd.f32 %v555, %v610
      %612 = vmatmul.f32.gmra.mxu0 %v534
      %v613 = vpop.f32.mrf.mxu0
      %v614 = vadd.f32 %v555, %v613
      %615 = vmatmul.f32.gmra.mxu0 %v535
      %v616 = vpop.f32.mrf.mxu0
      %v617 = vadd.f32 %v555, %v616
      %618 = vmatmul.f32.gmra.mxu0 %v536
      %v619 = vpop.f32.mrf.mxu0
      %v620 = vadd.f32 %v555, %v619
      %621 = vdwg.mxu0
      %622 = vst [vmem:[%s280] sm:$0xff] %v575
      %623 = vst [vmem:[%s280 + $0x8] sm:$0xff] %v578
      %624 = vst [vmem:[%s280 + $0x10] sm:$0xff] %v581
      %625 = vst [vmem:[%s280 + $0x18] sm:$0xff] %v584
      %626 = vst [vmem:[%s280 + $0x20] sm:$0xff] %v587
      %627 = vst [vmem:[%s280 + $0x28] sm:$0xff] %v590
      %628 = vst [vmem:[%s280 + $0x30] sm:$0xff] %v593
      %629 = vst [vmem:[%s280 + $0x38] sm:$0xff] %v596
      %630 = vst [vmem:[%s280 + $0x40] sm:$0xff] %v599
      %631 = vst [vmem:[%s280 + $0x48] sm:$0xff] %v602
      %632 = vst [vmem:[%s280 + $0x50] sm:$0xff] %v605
      %633 = vst [vmem:[%s280 + $0x58] sm:$0xff] %v608
      %634 = vst [vmem:[%s280 + $0x60] sm:$0xff] %v611
      %635 = vst [vmem:[%s280 + $0x68] sm:$0xff] %v614
      %636 = vst [vmem:[%s280 + $0x70] sm:$0xff] %v617
      %637 = vst [vmem:[%s280 + $0x78] sm:$0xff] %v620
      %s638 = smul.u32 16, %s18
      %p639 = scmp.lt.s32.totalorder %s638, 63
      %s640 = scalar_select %p639, %s638, 63
      %s641 = smul.addr %s640, 8
      %s642 = scalar_lea.vmem %s7, %s641
      // Predicated region
      $region49: #{_mlp_forward.1} parent=47 // pred_check
        %p643 = pneg %p188
      $region50: #{_mlp_forward.1} parent=47 // pred_check_branch
        %645 = sbr.rel (%p643) target = $region52
      $region51: #{_mlp_forward.1} parent=47 // pred_region
        %s646 = smul.u32 16, %s18
      $region52: #{_mlp_forward.1} parent=47 // pred_fallthru
        _
    $region48: #{_mlp_forward.1} parent=5 // pred_fallthru
      _
    %p647 = scmp.le.s32.totalorder 2, %s13
    // Predicated region
    $region53: #{_mlp_forward.1} parent=5 // pred_check
      %p648 = pneg %p647
    $region54: #{_mlp_forward.1} parent=5 // pred_check_branch
      %650 = sbr.rel (%p648) target = $region56
    $region55: #{_mlp_forward.1} parent=5 // pred_region
      %s651 = ssub.s32 %s13, 2
      // Predicated region
      $region57: #{_mlp_forward.1} parent=55 // pred_check
        %p652 = pneg %p194
      $region58: #{_mlp_forward.1} parent=55 // pred_check_branch
        %654 = sbr.rel (%p652) target = $region60
      $region59: #{_mlp_forward.1} parent=55 // pred_region
        %s655 = smul.u32 16, %s19
        %p656 = scmp.lt.s32.totalorder %s655, 63
        %s657 = scalar_select %p656, %s655, 63
        %s658 = smul.addr %s657, 8
        %s659 = scalar_lea.vmem %s7, %s658
      $region60: #{_mlp_forward.1} parent=55 // pred_fallthru
        _
    $region56: #{_mlp_forward.1} parent=5 // pred_fallthru
      _
  $region6: #{_mlp_forward.1} parent=0 // loop_footer
    %s17 = sadd.s32 1, %s13
  $region7: #{_mlp_forward.1} parent=0 // loop_footer_branch
    %12 = sbr.rel target = $region3
  $region8: #{_mlp_forward.1} parent=0 // loop_exit
    _

</llo_original>
